<compile_context>
chip_gen: v7x
topology: tpu7x:2x2x1
jax: 0.10.0
libtpu: 0.0.40
codegen_flags: <defaults>
</compile_context>

<pallas_src>
import jax
import jax.numpy as jnp
from jax.experimental import pallas as pl
from jax.experimental.pallas import tpu as pltpu

LANE_CANDIDATES = (1024, 512, 256, 128)   # lane-dense last dims (multiples of 128)
_SMALL_INPUT_BYTES = 256 * 1024           # below this, fused XLA elementwise already wins


def _scale_kernel(w_ref, x_ref, o_ref):
    # w_ref: SMEM (1, 1) f32 scalar; x_ref/o_ref: VMEM (TM, LANE) tiles.
    o_ref[...] = (w_ref[0, 0] * x_ref[...].astype(jnp.float32)).astype(o_ref.dtype)


def _tile_byte_budget():
    """Per-generation tile byte target (bigger tiles matter most on v7x's 3.2 TB/s HBM)."""
    try:
        kind = jax.devices()[0].device_kind.lower()
    except Exception:
        kind = ""
    if "v7" in kind:
        return 8 * 1024 * 1024   # 8 MiB tile; double-buffered in+out = 32 MiB <= v7x scoped
    if "v5" in kind:
        return 2 * 1024 * 1024   # v5e ~820 GB/s: 2 MiB tile already keeps overhead <10%
    return 4 * 1024 * 1024       # v6e / default: ~86% of HBM roofline measured


def _sublane_multiple(dtype):
    return {4: 8, 2: 16, 1: 32}.get(jnp.dtype(dtype).itemsize, 8)


def simple_regression_forward(w, x, *, force_kernel=False, tile_rows=None):
    """w: (1,) float32 parameter; x: arbitrary-shape float input (e.g. NCHW)."""
    out_dtype = jnp.result_type(w.dtype, x.dtype)     # torch promotion: f32 * bf16 -> f32
    total = x.size
    in_itemsize = jnp.dtype(x.dtype).itemsize
    out_itemsize = jnp.dtype(out_dtype).itemsize
    total_bytes = total * in_itemsize

    # Pick a lane width that divides the flat size exactly -> zero-copy reshape, no pad/slice.
    lane = next((l for l in LANE_CANDIDATES if total % l == 0), None)

    small = (total_bytes < _SMALL_INPUT_BYTES) and not force_kernel
    if lane is None or small:
        # Unaligned (flat size not a multiple of 128) or tiny input: a single fused XLA
        # multiply is already at roofline; the kernel would only add copies / launch cost.
        return (w[0] * x).astype(out_dtype)

    rows = total // lane
    x2d = x.reshape(rows, lane)                       # contiguous reshape, zero-copy

    # Dtype-aware tile rows (constant byte budget), rounded to the sublane multiple.
    sub = _sublane_multiple(x.dtype)
    if tile_rows is None:
        budget = _tile_byte_budget()
        tm = max(sub, (budget // (lane * in_itemsize)) // sub * sub)
    else:
        tm = max(sub, (tile_rows // sub) * sub)
    tm = min(tm, rows)                                # tm == rows bypasses the (8,128) rule

    # Scoped VMEM: 2-deep pipelining of (input + output) tile, plus headroom.
    tile_in = tm * lane * in_itemsize
    tile_out = tm * lane * out_itemsize
    vmem_limit = min(2 * (tile_in + tile_out) + (4 << 20), 48 << 20)

    cost = pl.CostEstimate(
        flops=total,
        transcendentals=0,
        bytes_accessed=total * in_itemsize + total * out_itemsize,
    )

    w_smem = w.reshape(1, 1).astype(jnp.float32)

    out2d = pl.pallas_call(
        _scale_kernel,
        out_shape=jax.ShapeDtypeStruct((rows, lane), out_dtype),
        grid=(pl.cdiv(rows, tm),),
        in_specs=[
            pl.BlockSpec(memory_space=pltpu.SMEM),       # scalar weight, whole array
            pl.BlockSpec((tm, lane), lambda i: (i, 0)),  # streaming input tile
        ],
        out_specs=pl.BlockSpec((tm, lane), lambda i: (i, 0)),
        compiler_params=pltpu.CompilerParams(
            dimension_semantics=("parallel",),
            vmem_limit_bytes=int(vmem_limit),
        ),
        cost_estimate=cost,
    )(w_smem, x2d)

    return out2d.reshape(x.shape)


if __name__ == "__main__":
    key = jax.random.PRNGKey(0)
    k_x, k_w, k_x2 = jax.random.split(key, 3)

    # Small NCHW input consistent with the module's elementwise forward.
    x = jax.random.normal(k_x, (2, 4, 16, 16), dtype=jnp.float32)

    # 1) Zero-init parameter, matching nn.Parameter(torch.zeros(1)); force the kernel path.
    w0 = jnp.zeros((1,), dtype=jnp.float32)
    out0 = jax.block_until_ready(simple_regression_forward(w0, x, force_kernel=True))
    assert out0.shape == x.shape and out0.dtype == x.dtype
    assert jnp.allclose(out0, w0[0] * x, atol=0.0, rtol=0.0)

    # 2) Non-trivial weight to actually exercise the multiply.
    w1 = jax.random.normal(k_w, (1,), dtype=jnp.float32)
    out1 = jax.block_until_ready(simple_regression_forward(w1, x, force_kernel=True))
    assert jnp.allclose(out1, w1[0] * x, atol=1e-6, rtol=1e-6)

    # 3) Partial last block: rows=24 with tile_rows=16 -> 2 grid steps, last one masked.
    x3 = jax.random.normal(k_x2, (3, 4, 32, 64), dtype=jnp.float32)   # 24 * 1024 elements
    out3 = jax.block_until_ready(
        simple_regression_forward(w1, x3, force_kernel=True, tile_rows=16))
    assert jnp.allclose(out3, w1[0] * x3, atol=1e-6, rtol=1e-6)

    # 4) bf16 input: output follows PyTorch promotion (float32), computed in f32.
    xb = x.astype(jnp.bfloat16)
    outb = jax.block_until_ready(simple_regression_forward(w1, xb, force_kernel=True))
    assert outb.dtype == jnp.float32
    assert jnp.allclose(outb, w1[0] * xb.astype(jnp.float32), atol=1e-5, rtol=1e-5)

    # 5) Unaligned / tiny shape takes the plain-JAX fallback path (no pad/slice copies).
    x5 = jax.random.normal(k_x, (2, 3, 5, 7), dtype=jnp.float32)
    out5 = jax.block_until_ready(simple_regression_forward(w1, x5))
    assert jnp.allclose(out5, w1[0] * x5, atol=1e-6, rtol=1e-6)

    print("KERNEL_OK")
</pallas_src>

<mosaic_0001>
module attributes {stable_mosaic.version = 11 : i64} {
  func.func @_scale_kernel(%arg0: i32, %arg1: memref<1x1xf32, #tpu.memory_space<smem>>, %arg2: memref<2x1024xf32, #tpu.memory_space<vmem>>, %arg3: memref<2x1024xf32, #tpu.memory_space<vmem>>) attributes {dimension_semantics = [#tpu.dimension_semantics<parallel>], iteration_bounds = array<i64: 1>, scalar_prefetch = 0 : i64, scratch_operands = 0 : i64, tpu.core_type = #tpu.core_type<tc>, window_params = [{transform_indices = @transform_0, window_bounds = array<i64: 1, 1>}, {transform_indices = @transform_1, window_bounds = array<i64: 2, 1024>}, {transform_indices = @transform_2, window_bounds = array<i64: 2, 1024>}]} {
    %c0 = arith.constant 0 : index
    %c0_0 = arith.constant 0 : index
    %0 = memref.load %arg1[%c0, %c0_0] : memref<1x1xf32, #tpu.memory_space<smem>>
    %c0_1 = arith.constant 0 : index
    %c0_2 = arith.constant 0 : index
    %1 = vector.load %arg2[%c0_1, %c0_2] : memref<2x1024xf32, #tpu.memory_space<vmem>>, vector<2x1024xf32>
    %2 = vector.broadcast %0 : f32 to vector<2x1024xf32>
    %3 = arith.mulf %2, %1 : vector<2x1024xf32>
    %c0_3 = arith.constant 0 : index
    %c0_4 = arith.constant 0 : index
    %4 = vector.load %arg3[%c0_3, %c0_4] : memref<2x1024xf32, #tpu.memory_space<vmem>>, vector<2x1024xf32>
    tpu.vector_store %arg3[%c0_3, %c0_4], %3 {strides = array<i32>} : memref<2x1024xf32, #tpu.memory_space<vmem>>, vector<2x1024xf32>,
    return
  }
  func.func @transform_0(%arg0: i32) -> (i32, i32) {
    %c0_i32 = arith.constant 0 : i32
    %c0_i32_0 = arith.constant 0 : i32
    %c0_i32_1 = arith.constant 0 : i32
    return %c0_i32, %c0_i32_0 : i32, i32
  }
  func.func @transform_1(%arg0: i32) -> (i32, i32) {
    %c0_i32 = arith.constant 0 : i32
    %c0_i32_0 = arith.constant 0 : i32
    return %arg0, %c0_i32 : i32, i32
  }
  func.func @transform_2(%arg0: i32) -> (i32, i32) {
    %c0_i32 = arith.constant 0 : i32
    %c0_i32_0 = arith.constant 0 : i32
    return %arg0, %c0_i32 : i32, i32
  }
}

</mosaic_0001>

<llo_original>
// kernel: tpu_custom_call.1
$region0: #{tpu_custom_call.1}
  #allocation0 [shape = 'u32[]', space=smem, size = 0x4, offset = 0x4, fixed_abs, tag = 'smem constant byte address 0x4 - core index']
  #allocation1 [shape = 'u32[144,128]{1,0:T(1,128)}', space=vmem, size = 0x12000, scoped, tag = 'internal scratch']
  #allocation2 [shape = 'f32[1,1]{1,0:T(1,128)S(6)}', space=smem, size = 0x200, scoped, tag = 'scoped memory for tpu_custom_call.1']
  %s0 = inlined_call_operand.<no memory space> [shape: f32[1,1], index: 0, kind: input, shape index: {}]
  %s1 = inlined_call_operand.hbm [shape: f32[2,1024], index: 1, kind: input, shape index: {}]
  %s2 = inlined_call_operand.hbm [shape: f32[2,1024], index: 2, kind: output, shape index: {}]
  %s3 = sld [smem:[#allocation0]]
  $region22: #{tpu_custom_call.1} parent=0
    _
  %s5 = ssub.s32 1, %s3
  %s6 = scalar_select 0, %s5, %s3
  %7 = sst [smem:[#allocation2]] %s0
  $region1: #{tpu_custom_call.1} parent=0
    #allocation3 [shape = 'u8[8192]{0}', space=vmem, size = 0x2000, scoped, tag = 'input window, operand 1, single buffered']
    #allocation4 [shape = 's32[1]{0}', space=sflag, size = 0x4, scoped, tag = 'scoped memory for tpu_custom_call.1']
    #allocation5 [shape = 's32[1]{0}', space=sflag, size = 0x4, scoped, tag = 'scoped memory for tpu_custom_call.1']
    #allocation6 [shape = 'u8[8192]{0}', space=vmem, size = 0x2000, scoped, tag = 'output window, operand 0, single buffered']
    %8 = vsyncpa [#allocation4], 0
    %9 = vsyncpa [#allocation5], 0
    // Predicated region
    $region2: #{tpu_custom_call.1} parent=1 // pred_check
      _
    $region3: #{tpu_custom_call.1} parent=1 // pred_check_branch
      %11 = sbr.rel (0) target = $region5
    $region4: #{tpu_custom_call.1} parent=1 // pred_region
      _
    $region5: #{tpu_custom_call.1} parent=1 // pred_fallthru
      _
    // Predicated region
    $region6: #{tpu_custom_call.1} parent=1 // pred_check
      _
    $region7: #{tpu_custom_call.1} parent=1 // pred_check_branch
      %13 = sbr.rel (0) target = $region9
    $region8: #{tpu_custom_call.1} parent=1 // pred_region
      %s15 = ssub.s32 256, 256
      %16 = vsyncadd [#allocation4], %s15
      %s18 = sshll.u32 [#allocation3], 4
      %s19 = int_to_ptr.vmem [resolvable:$true] %s18
      %21 = dma.hbm_to_vmem [thread:$0]  %s1, 256, %s19, [#allocation4]
    $region9: #{tpu_custom_call.1} parent=1 // pred_fallthru
      _
    // Predicated region
    $region10: #{tpu_custom_call.1} parent=1 // pred_check
      _
    $region11: #{tpu_custom_call.1} parent=1 // pred_check_branch
      %23 = sbr.rel (0) target = $region13
    $region12: #{tpu_custom_call.1} parent=1 // pred_region
      %24 = dma.done [#allocation4], 256
    $region13: #{tpu_custom_call.1} parent=1 // pred_fallthru
      _
    %s25 = sld [smem:[#allocation2]]
    %v26 = vld [vmem:[#allocation3] sm:$0xff]
    %v27 = vld [vmem:[#allocation3 + $0x8] sm:$0xff]
    %v28 = vstv %s25
    %v29 = vmul.f32 %v28, %v26
    %v30 = vmul.f32 %v28, %v27
    %31 = vst [vmem:[#allocation6] sm:$0xff] %v29
    %32 = vst [vmem:[#allocation6 + $0x8] sm:$0xff] %v30
    // Predicated region
    $region14: #{tpu_custom_call.1} parent=1 // pred_check
      _
    $region15: #{tpu_custom_call.1} parent=1 // pred_check_branch
      %34 = sbr.rel (0) target = $region17
    $region16: #{tpu_custom_call.1} parent=1 // pred_region
      %s36 = ssub.s32 256, 256
      %37 = vsyncadd [#allocation5], %s36
      %s39 = sshll.u32 [#allocation6], 4
      %s40 = int_to_ptr.vmem [resolvable:$true] %s39
      %42 = dma.vmem_to_hbm [thread:$0]  %s40, 256, %s2, [#allocation5]
    $region17: #{tpu_custom_call.1} parent=1 // pred_fallthru
      _
    // Predicated region
    $region18: #{tpu_custom_call.1} parent=1 // pred_check
      _
    $region19: #{tpu_custom_call.1} parent=1 // pred_check_branch
      %44 = sbr.rel (0) target = $region21
    $region20: #{tpu_custom_call.1} parent=1 // pred_region
      %45 = dma.done [#allocation5], 256
    $region21: #{tpu_custom_call.1} parent=1 // pred_fallthru
      _
    %46 = vsyncpa [#allocation4], 1
    %47 = vsyncpa [#allocation5], 1

</llo_original>
